<compile_context>
chip_gen: v6e
topology: v6e:2x2x1
jax: 0.10.0
libtpu: 0.0.40
codegen_flags: <defaults>
</compile_context>

<pallas_src>
import jax
import jax.numpy as jnp
from jax import lax
from jax.experimental import pallas as pl
from jax.experimental.pallas import tpu as pltpu


# ---------------------------------------------------------------------------
# Kernel 1: per-query complex product + regularizer factors (elementwise)
# ---------------------------------------------------------------------------
def _query_kernel(lhs_ref, rel_ref, rhs_ref,
                  q_ref, lnorm_ref, renorm_ref, rhnorm_ref):
    R = lhs_ref.shape[1] // 2

    lhs = lhs_ref[...]
    rel = rel_ref[...]
    rhs = rhs_ref[...]
    lhs_re, lhs_im = lhs[:, :R], lhs[:, R:]
    rel_re, rel_im = rel[:, :R], rel[:, R:]
    rhs_re, rhs_im = rhs[:, :R], rhs[:, R:]

    # complex product of the query embeddings (f32), stored via two lane
    # slices instead of a concatenate (avoids a relayout copy)
    q_ref[:, :R] = lhs_re * rel_re - lhs_im * rel_im
    q_ref[:, R:] = lhs_re * rel_im + lhs_im * rel_re

    lnorm_ref[...] = jnp.sqrt(lhs_re * lhs_re + lhs_im * lhs_im)
    renorm_ref[...] = jnp.sqrt(rel_re * rel_re + rel_im * rel_im)
    rhnorm_ref[...] = jnp.sqrt(rhs_re * rhs_re + rhs_im * rhs_im)


# ---------------------------------------------------------------------------
# Kernel 2a: scores = q @ W^T with row-major table tiles (tile_n, 2R)
# ---------------------------------------------------------------------------
def _score_rows_kernel(q_ref, w_ref, out_ref):
    q = q_ref[...]                                   # (tile_b, 2R) f32, resident per i
    w = w_ref[...].astype(jnp.float32)               # (tile_n, 2R) streamed (f32/bf16)
    out_ref[...] = lax.dot_general(
        q, w,
        dimension_numbers=(((1,), (1,)), ((), ())),  # contract on 2R (RHS^T)
        preferred_element_type=jnp.float32,
    )


# ---------------------------------------------------------------------------
# Kernel 2b: scores = q @ Wt with pre-transposed table tiles (2R, tile_n)
# ---------------------------------------------------------------------------
def _score_cols_kernel(q_ref, wt_ref, out_ref):
    q = q_ref[...]                                   # (tile_b, 2R) f32
    wt = wt_ref[...].astype(jnp.float32)             # (2R, tile_n) streamed
    out_ref[...] = jnp.dot(q, wt, preferred_element_type=jnp.float32)


def _round_up(x, m):
    return -(-x // m) * m


def _vmem_capacity_bytes():
    try:
        return int(pltpu.get_tpu_info().vmem_capacity_bytes)
    except Exception:
        return 64 << 20        # conservative fallback: v7x per-TensorCore VMEM


def complex_forward(x, ent_weight, rel_weight, rank, *,
                    score_table=None, score_table_transposed=False,
                    tile_n=None, tile_b=256):
    """ComplEx.forward.

    x          : (B, 3) int32 triples (lhs, rel, rhs)
    ent_weight : (n_entities, 2*rank) float32   (gathers + norms, module-exact)
    rel_weight : (n_relations, 2*rank) float32
    score_table: optional caller-cached copy of the entity table used only for
                 scoring — e.g. pre-cast to bf16 (halves HBM traffic) and/or
                 pre-transposed to (2*rank, n_entities).  Cast/transpose ONCE
                 by the caller, never per call.  None -> stream ent_weight.
    returns (scores (B, n_entities),
             (|lhs| (B, rank), |rel| (B, rank), |rhs| (B, rank)))
    """
    B = x.shape[0]
    n_ent, two_r = ent_weight.shape
    assert two_r == 2 * rank
    assert rank % 8 == 0, "rank must be a multiple of 8 for clean TPU layout"

    table = ent_weight if score_table is None else score_table
    if score_table_transposed:
        assert table.shape == (two_r, n_ent)
    else:
        assert table.shape == (n_ent, two_r)

    # ---- glue: embedding gathers (data-dependent, tiny) ----
    lhs = jnp.take(ent_weight, x[:, 0], axis=0)        # (B, 2R)
    rel = jnp.take(rel_weight, x[:, 1], axis=0)        # (B, 2R)
    rhs = jnp.take(ent_weight, x[:, 2], axis=0)        # (B, 2R)

    B_pad = _round_up(B, 8)                            # sublane multiple
    if B_pad != B:
        pad = ((0, B_pad - B), (0, 0))
        lhs, rel, rhs = jnp.pad(lhs, pad), jnp.pad(rel, pad), jnp.pad(rhs, pad)

    # ---- kernel 1: q + norms (computed once, not per entity tile) ----
    q, lnorm, renorm, rhnorm = pl.pallas_call(
        _query_kernel,
        out_shape=(
            jax.ShapeDtypeStruct((B_pad, two_r), jnp.float32),
            jax.ShapeDtypeStruct((B_pad, rank), jnp.float32),
            jax.ShapeDtypeStruct((B_pad, rank), jnp.float32),
            jax.ShapeDtypeStruct((B_pad, rank), jnp.float32),
        ),
    )(lhs, rel, rhs)

    # ---- tiling for the streaming score kernel ----
    tile_b = min(_round_up(tile_b, 8), B_pad)
    w_item = jnp.dtype(table.dtype).itemsize

    vmem_cap = _vmem_capacity_bytes()
    usable = max(16 << 20, min(vmem_cap - (16 << 20), 96 << 20))   # <= 48 MiB on v7x
    budget = max(8 << 20, usable - (4 << 20))                      # headroom for scratch

    if tile_n is None:
        # 2x table tile + 2x f32 out tile + q must fit the budget
        denom = 2 * two_r * w_item + 2 * tile_b * 4
        tile_n = (budget - 2 * tile_b * two_r * 4) // denom
        tile_n = int(max(512, min(tile_n, 32768)))
    tile_n = min(_round_up(int(tile_n), 128), _round_up(n_ent, 128))
    # prefer >= 2 entity tiles so v7x's two TensorCores both get work
    if tile_n >= n_ent and n_ent > 128:
        tile_n = _round_up(pl.cdiv(n_ent, 2), 128)

    nb = pl.cdiv(B_pad, tile_b)
    nn = pl.cdiv(n_ent, tile_n)

    vmem_need = (2 * tile_n * two_r * w_item          # double-buffered table tile
                 + 2 * tile_b * tile_n * 4            # double-buffered score tile
                 + 2 * tile_b * two_r * 4)            # q
    vmem_limit = int(min(max(2 * vmem_need, 16 << 20), usable))

    if score_table_transposed:
        kernel = _score_cols_kernel
        w_spec = pl.BlockSpec((two_r, tile_n), lambda i, j: (0, j))
    else:
        kernel = _score_rows_kernel
        w_spec = pl.BlockSpec((tile_n, two_r), lambda i, j: (j, 0))
        # TODO(synk): on v5e, if xprof still shows exposed DMA issue latency,
        # add pipeline_mode=pl.Buffered(3) to this BlockSpec.

    scores = pl.pallas_call(
        kernel,
        out_shape=jax.ShapeDtypeStruct((B_pad, n_ent), jnp.float32),
        grid_spec=pltpu.PrefetchScalarGridSpec(
            num_scalar_prefetch=0,
            grid=(nb, nn),
            in_specs=[
                pl.BlockSpec((tile_b, two_r), lambda i, j: (i, 0)),   # q
                w_spec,                                               # entity tile
            ],
            out_specs=pl.BlockSpec((tile_b, tile_n), lambda i, j: (i, j)),
        ),
        compiler_params=pltpu.CompilerParams(
            dimension_semantics=("parallel", "parallel"),  # megacore-shardable
            vmem_limit_bytes=vmem_limit,
        ),
    )(q, table)

    if B_pad != B:
        scores = scores[:B]
        lnorm, renorm, rhnorm = lnorm[:B], renorm[:B], rhnorm[:B]
    return scores, (lnorm, renorm, rhnorm)


# ---------------------------------------------------------------------------
# plain-JAX reference (mirrors the PyTorch module)
# ---------------------------------------------------------------------------
def _reference_forward(x, ent_weight, rel_weight, rank):
    lhs = ent_weight[x[:, 0]]
    rel = rel_weight[x[:, 1]]
    rhs = ent_weight[x[:, 2]]
    l = (lhs[:, :rank], lhs[:, rank:])
    r = (rel[:, :rank], rel[:, rank:])
    h = (rhs[:, :rank], rhs[:, rank:])
    to_re, to_im = ent_weight[:, :rank], ent_weight[:, rank:]
    scores = ((l[0] * r[0] - l[1] * r[1]) @ to_re.T
              + (l[0] * r[1] + l[1] * r[0]) @ to_im.T)
    return scores, (jnp.sqrt(l[0] ** 2 + l[1] ** 2),
                    jnp.sqrt(r[0] ** 2 + r[1] ** 2),
                    jnp.sqrt(h[0] ** 2 + h[1] ** 2))


if __name__ == "__main__":
    # sizes = (n_entities, n_relations, n_entities), rank, init_size as in __init__
    n_entities = 256
    n_relations = 32
    rank = 64
    init_size = 0.001
    batch = 8

    key = jax.random.PRNGKey(0)
    k_ent, k_rel, k_lhs, k_r, k_rhs = jax.random.split(key, 5)

    # nn.Embedding default init: N(0, 1), then scaled by init_size
    ent_weight = jax.random.normal(k_ent, (n_entities, 2 * rank), jnp.float32) * init_size
    rel_weight = jax.random.normal(k_rel, (n_relations, 2 * rank), jnp.float32) * init_size

    x = jnp.stack([
        jax.random.randint(k_lhs, (batch,), 0, n_entities),
        jax.random.randint(k_r, (batch,), 0, n_relations),
        jax.random.randint(k_rhs, (batch,), 0, n_entities),
    ], axis=1).astype(jnp.int32)                       # (B, 3) triples

    ref_scores, ref_factors = _reference_forward(x, ent_weight, rel_weight, rank)

    # --- 1) f32 path: exact module semantics, zero extra table passes ---
    scores, factors = complex_forward(x, ent_weight, rel_weight, rank)
    jax.block_until_ready(scores)
    jax.block_until_ready(factors)
    assert jnp.allclose(scores, ref_scores, rtol=1e-5, atol=1e-8), "f32 scores mismatch"
    for a, b in zip(factors, ref_factors):
        assert jnp.allclose(a, b, rtol=1e-5, atol=1e-8), "f32 factor mismatch"

    # --- 2) bf16 streamed table (cast ONCE by the caller, q stays f32) ---
    ent_table_bf16 = ent_weight.astype(jnp.bfloat16)           # cached across calls
    scores_bf16, factors_bf16 = complex_forward(
        x, ent_weight, rel_weight, rank, score_table=ent_table_bf16)
    jax.block_until_ready(scores_bf16)
    assert jnp.allclose(scores_bf16, ref_scores, rtol=5e-2, atol=1e-9), "bf16 scores mismatch"
    for a, b in zip(factors_bf16, ref_factors):
        assert jnp.allclose(a, b, rtol=1e-5, atol=1e-8), "bf16 factor mismatch"

    # --- 3) pre-transposed (2R, n_ent) table: no per-tile XLU transpose ---
    ent_table_t = ent_weight.T                                  # transposed ONCE, reused
    scores_t, _ = complex_forward(
        x, ent_weight, rel_weight, rank,
        score_table=ent_table_t, score_table_transposed=True)
    jax.block_until_ready(scores_t)
    assert jnp.allclose(scores_t, ref_scores, rtol=1e-4, atol=1e-11), "transposed scores mismatch"

    print("KERNEL_OK")
</pallas_src>

<mosaic_0001>
module attributes {stable_mosaic.version = 11 : i64} {
  func.func @_query_kernel(%arg0: memref<8x128xf32, #tpu.memory_space<vmem>>, %arg1: memref<8x128xf32, #tpu.memory_space<vmem>>, %arg2: memref<8x128xf32, #tpu.memory_space<vmem>>, %arg3: memref<8x128xf32, #tpu.memory_space<vmem>>, %arg4: memref<8x64xf32, #tpu.memory_space<vmem>>, %arg5: memref<8x64xf32, #tpu.memory_space<vmem>>, %arg6: memref<8x64xf32, #tpu.memory_space<vmem>>) attributes {dimension_semantics = [], scalar_prefetch = 0 : i64, scratch_operands = 0 : i64, tpu.core_type = #tpu.core_type<tc>} {
    %c0 = arith.constant 0 : index
    %c0_0 = arith.constant 0 : index
    %0 = vector.load %arg0[%c0, %c0_0] : memref<8x128xf32, #tpu.memory_space<vmem>>, vector<8x128xf32>
    %c0_1 = arith.constant 0 : index
    %c0_2 = arith.constant 0 : index
    %1 = vector.load %arg1[%c0_1, %c0_2] : memref<8x128xf32, #tpu.memory_space<vmem>>, vector<8x128xf32>
    %c0_3 = arith.constant 0 : index
    %c0_4 = arith.constant 0 : index
    %2 = vector.load %arg2[%c0_3, %c0_4] : memref<8x128xf32, #tpu.memory_space<vmem>>, vector<8x128xf32>
    %3 = vector.extract_strided_slice %0 {offsets = [0, 0], sizes = [8, 64], strides = [1, 1]} : vector<8x128xf32> to vector<8x64xf32>
    %4 = vector.extract_strided_slice %0 {offsets = [0, 64], sizes = [8, 64], strides = [1, 1]} : vector<8x128xf32> to vector<8x64xf32>
    %5 = vector.extract_strided_slice %1 {offsets = [0, 0], sizes = [8, 64], strides = [1, 1]} : vector<8x128xf32> to vector<8x64xf32>
    %6 = vector.extract_strided_slice %1 {offsets = [0, 64], sizes = [8, 64], strides = [1, 1]} : vector<8x128xf32> to vector<8x64xf32>
    %7 = vector.extract_strided_slice %2 {offsets = [0, 0], sizes = [8, 64], strides = [1, 1]} : vector<8x128xf32> to vector<8x64xf32>
    %8 = vector.extract_strided_slice %2 {offsets = [0, 64], sizes = [8, 64], strides = [1, 1]} : vector<8x128xf32> to vector<8x64xf32>
    %9 = arith.mulf %3, %5 : vector<8x64xf32>
    %10 = arith.mulf %4, %6 : vector<8x64xf32>
    %11 = arith.subf %9, %10 : vector<8x64xf32>
    %c0_5 = arith.constant 0 : index
    %c0_6 = arith.constant 0 : index
    %12 = vector.load %arg3[%c0_5, %c0_6] : memref<8x128xf32, #tpu.memory_space<vmem>>, vector<8x64xf32>
    tpu.vector_store %arg3[%c0_5, %c0_6], %11 {strides = array<i32>} : memref<8x128xf32, #tpu.memory_space<vmem>>, vector<8x64xf32>,
    %13 = arith.mulf %3, %6 : vector<8x64xf32>
    %14 = arith.mulf %4, %5 : vector<8x64xf32>
    %15 = arith.addf %13, %14 : vector<8x64xf32>
    %c0_7 = arith.constant 0 : index
    %c64 = arith.constant 64 : index
    %16 = vector.load %arg3[%c0_7, %c64] : memref<8x128xf32, #tpu.memory_space<vmem>>, vector<8x64xf32>
    tpu.vector_store %arg3[%c0_7, %c64], %15 {strides = array<i32>} : memref<8x128xf32, #tpu.memory_space<vmem>>, vector<8x64xf32>,
    %17 = arith.mulf %3, %3 : vector<8x64xf32>
    %18 = arith.mulf %4, %4 : vector<8x64xf32>
    %19 = arith.addf %17, %18 : vector<8x64xf32>
    %20 = math.sqrt %19 : vector<8x64xf32>
    %c0_8 = arith.constant 0 : index
    %c0_9 = arith.constant 0 : index
    %21 = vector.load %arg4[%c0_8, %c0_9] : memref<8x64xf32, #tpu.memory_space<vmem>>, vector<8x64xf32>
    tpu.vector_store %arg4[%c0_8, %c0_9], %20 {strides = array<i32>} : memref<8x64xf32, #tpu.memory_space<vmem>>, vector<8x64xf32>,
    %22 = arith.mulf %5, %5 : vector<8x64xf32>
    %23 = arith.mulf %6, %6 : vector<8x64xf32>
    %24 = arith.addf %22, %23 : vector<8x64xf32>
    %25 = math.sqrt %24 : vector<8x64xf32>
    %c0_10 = arith.constant 0 : index
    %c0_11 = arith.constant 0 : index
    %26 = vector.load %arg5[%c0_10, %c0_11] : memref<8x64xf32, #tpu.memory_space<vmem>>, vector<8x64xf32>
    tpu.vector_store %arg5[%c0_10, %c0_11], %25 {strides = array<i32>} : memref<8x64xf32, #tpu.memory_space<vmem>>, vector<8x64xf32>,
    %27 = arith.mulf %7, %7 : vector<8x64xf32>
    %28 = arith.mulf %8, %8 : vector<8x64xf32>
    %29 = arith.addf %27, %28 : vector<8x64xf32>
    %30 = math.sqrt %29 : vector<8x64xf32>
    %c0_12 = arith.constant 0 : index
    %c0_13 = arith.constant 0 : index
    %31 = vector.load %arg6[%c0_12, %c0_13] : memref<8x64xf32, #tpu.memory_space<vmem>>, vector<8x64xf32>
    tpu.vector_store %arg6[%c0_12, %c0_13], %30 {strides = array<i32>} : memref<8x64xf32, #tpu.memory_space<vmem>>, vector<8x64xf32>,
    return
  }
}

</mosaic_0001>

<llo_original>
// kernel: tpu_custom_call.1
$region0: #{tpu_custom_call.1}
  #allocation0 [shape = 'u32[]', space=smem, size = 0x4, offset = 0x4, fixed_abs, tag = 'smem constant byte address 0x4 - core index']
  #allocation1 [shape = 'u32[144,128]{1,0:T(1,128)}', space=vmem, size = 0x12000, scoped, tag = 'internal scratch']
  %s0 = inlined_call_operand.hbm [shape: f32[8,128], index: 0, kind: input, shape index: {}]
  %s1 = inlined_call_operand.hbm [shape: f32[8,128], index: 1, kind: input, shape index: {}]
  %s2 = inlined_call_operand.hbm [shape: f32[8,128], index: 2, kind: input, shape index: {}]
  %s3 = inlined_call_operand.hbm [shape: f32[8,128], index: 3, kind: output, shape index: {0}]
  %s4 = inlined_call_operand.hbm [shape: f32[8,64], index: 4, kind: output, shape index: {1}]
  %s5 = inlined_call_operand.hbm [shape: f32[8,64], index: 5, kind: output, shape index: {2}]
  %s6 = inlined_call_operand.hbm [shape: f32[8,64], index: 6, kind: output, shape index: {3}]
  %7 = xla_tuple %s3, %s4, %s5, %s6
  %s8 = sld [smem:[#allocation0]]
  $region58: #{tpu_custom_call.1} parent=0
    _
  %s10 = ssub.s32 1, %s8
  %s11 = scalar_select 0, %s10, %s8
  $region1: #{tpu_custom_call.1} parent=0
    #allocation2 [shape = 'u8[4096]{0}', space=vmem, size = 0x1000, scoped, tag = 'input window, operand 0, single buffered']
    #allocation3 [shape = 's32[1]{0}', space=sflag, size = 0x4, scoped, tag = 'scoped memory for tpu_custom_call.1']
    #allocation4 [shape = 's32[1]{0}', space=sflag, size = 0x4, scoped, tag = 'scoped memory for tpu_custom_call.1']
    #allocation5 [shape = 'u8[4096]{0}', space=vmem, size = 0x1000, scoped, tag = 'input window, operand 1, single buffered']
    #allocation6 [shape = 's32[1]{0}', space=sflag, size = 0x4, scoped, tag = 'scoped memory for tpu_custom_call.1']
    #allocation7 [shape = 'u8[4096]{0}', space=vmem, size = 0x1000, scoped, tag = 'input window, operand 2, single buffered']
    #allocation8 [shape = 'u8[4096]{0}', space=vmem, size = 0x1000, scoped, tag = 'output window, operand 0, single buffered']
    #allocation9 [shape = 'u8[4096]{0}', space=vmem, size = 0x1000, scoped, tag = 'output window, operand 1, single buffered']
    #allocation10 [shape = 's32[1]{0}', space=sflag, size = 0x4, scoped, tag = 'scoped memory for tpu_custom_call.1']
    #allocation11 [shape = 'u8[4096]{0}', space=vmem, size = 0x1000, scoped, tag = 'output window, operand 2, single buffered']
    #allocation12 [shape = 'u8[4096]{0}', space=vmem, size = 0x1000, scoped, tag = 'output window, operand 3, single buffered']
    #allocation13 [shape = 's32[1]{0}', space=sflag, size = 0x4, scoped, tag = 'scoped memory for tpu_custom_call.1']
    %12 = vsyncpa [#allocation3], 0
    %13 = vsyncpa [#allocation6], 0
    %14 = vsyncpa [#allocation4], 0
    %15 = vsyncpa [#allocation10], 0
    %16 = vsyncpa [#allocation13], 0
    // Predicated region
    $region2: #{tpu_custom_call.1} parent=1 // pred_check
      _
    $region3: #{tpu_custom_call.1} parent=1 // pred_check_branch
      %18 = sbr.rel (0) target = $region5
    $region4: #{tpu_custom_call.1} parent=1 // pred_region
      %s20 = ssub.s32 128, 128
      %21 = vsyncadd [#allocation3], %s20
      %s23 = sshll.u32 [#allocation2], 4
      %s24 = int_to_ptr.vmem [resolvable:$true] %s23
      %26 = dma.hbm_to_vmem [thread:$0]  %s0, 128, %s24, [#allocation3]
    $region5: #{tpu_custom_call.1} parent=1 // pred_fallthru
      _
    // Predicated region
    $region6: #{tpu_custom_call.1} parent=1 // pred_check
      _
    $region7: #{tpu_custom_call.1} parent=1 // pred_check_branch
      %28 = sbr.rel (0) target = $region9
    $region8: #{tpu_custom_call.1} parent=1 // pred_region
      %s30 = ssub.s32 128, 128
      %31 = vsyncadd [#allocation6], %s30
      %s33 = sshll.u32 [#allocation5], 4
      %s34 = int_to_ptr.vmem [resolvable:$true] %s33
      %36 = dma.hbm_to_vmem [thread:$0]  %s1, 128, %s34, [#allocation6]
    $region9: #{tpu_custom_call.1} parent=1 // pred_fallthru
      _
    // Predicated region
    $region10: #{tpu_custom_call.1} parent=1 // pred_check
      _
    $region11: #{tpu_custom_call.1} parent=1 // pred_check_branch
      %38 = sbr.rel (0) target = $region13
    $region12: #{tpu_custom_call.1} parent=1 // pred_region
      %s40 = ssub.s32 128, 128
      %41 = vsyncadd [#allocation6], %s40
      %s43 = sshll.u32 [#allocation7], 4
      %s44 = int_to_ptr.vmem [resolvable:$true] %s43
      %46 = dma.hbm_to_vmem [thread:$0]  %s2, 128, %s44, [#allocation6]
    $region13: #{tpu_custom_call.1} parent=1 // pred_fallthru
      _
    // Predicated region
    $region14: #{tpu_custom_call.1} parent=1 // pred_check
      _
    $region15: #{tpu_custom_call.1} parent=1 // pred_check_branch
      %48 = sbr.rel (0) target = $region17
    $region16: #{tpu_custom_call.1} parent=1 // pred_region
      %49 = dma.done [#allocation3], 128
    $region17: #{tpu_custom_call.1} parent=1 // pred_fallthru
      _
    // Predicated region
    $region18: #{tpu_custom_call.1} parent=1 // pred_check
      _
    $region19: #{tpu_custom_call.1} parent=1 // pred_check_branch
      %51 = sbr.rel (0) target = $region21
    $region20: #{tpu_custom_call.1} parent=1 // pred_region
      %52 = dma.done [#allocation6], 128
    $region21: #{tpu_custom_call.1} parent=1 // pred_fallthru
      _
    // Predicated region
    $region22: #{tpu_custom_call.1} parent=1 // pred_check
      _
    $region23: #{tpu_custom_call.1} parent=1 // pred_check_branch
      %54 = sbr.rel (0) target = $region25
    $region24: #{tpu_custom_call.1} parent=1 // pred_region
      %55 = dma.done [#allocation6], 128
    $region25: #{tpu_custom_call.1} parent=1 // pred_fallthru
      _
    %v56 = vld [vmem:[#allocation2] sm:$0xff]
    %v57 = vld [vmem:[#allocation5] sm:$0xff]
    %v58 = vld [vmem:[#allocation7] sm:$0xff]
    %v59 = vmul.f32 %v56, %v57
    %61 = vrot.lane.b32.xlu0 %v59, 64
    %v62 = vpop.permute.xlu0 %61
    %v64 = vsub.f32 %v59, %v62
    %vm65 = vcmask 523264
    %66 = vst.msk [vmem:[#allocation8] sm:$0xff] %vm65, %v64
    %68 = vrot.lane.b32.xlu0 %v57, 64
    %v69 = vpop.permute.xlu0 %68
    %v71 = vmul.f32 %v56, %v69
    %73 = vrot.lane.b32.xlu0 %v71, 64
    %v74 = vpop.permute.xlu0 %73
    %v76 = vadd.f32 %v71, %v74
    %78 = vrot.lane.b32.xlu0 %v76, 64
    %v79 = vpop.permute.xlu0 %78
    %vm81 = vcmask 1048064
    %82 = vst.msk [vmem:[#allocation8] sm:$0xff] %vm81, %v79
    %v83 = vmul.f32 %v56, %v56
    %85 = vrot.lane.b32.xlu0 %v83, 64
    %v86 = vpop.permute.xlu0 %85
    %v88 = vadd.f32 %v83, %v86
    %v89 = vrsqrt.pop %v88
    %v90 = vmul.f32 %v88, %v89
    %vm91 = vcmp.eq.f32.partialorder %v88, inf
    %v92 = vsel %vm91, %v88, %v90
    %vm93 = vcmp.eq.f32.partialorder %v88, 0.0
    %v94 = vand.u32 %v88, 2147483648
    %v95 = vsel %vm93, %v94, %v92
    %96 = vst.msk [vmem:[#allocation9] sm:$0xff] %vm65, %v95
    %v97 = vmul.f32 %v57, %v57
    %99 = vrot.lane.b32.xlu0 %v97, 64
    %v100 = vpop.permute.xlu0 %99
    %v102 = vadd.f32 %v97, %v100
    %v103 = vrsqrt.pop %v102
    %v104 = vmul.f32 %v102, %v103
    %vm105 = vcmp.eq.f32.partialorder %v102, inf
    %v106 = vsel %vm105, %v102, %v104
    %vm107 = vcmp.eq.f32.partialorder %v102, 0.0
    %v108 = vand.u32 %v102, 2147483648
    %v109 = vsel %vm107, %v108, %v106
    %110 = vst.msk [vmem:[#allocation11] sm:$0xff] %vm65, %v109
    %v111 = vmul.f32 %v58, %v58
    %113 = vrot.lane.b32.xlu0 %v111, 64
    %v114 = vpop.permute.xlu0 %113
    %v116 = vadd.f32 %v111, %v114
    %v117 = vrsqrt.pop %v116
    %v118 = vmul.f32 %v116, %v117
    %vm119 = vcmp.eq.f32.partialorder %v116, inf
    %v120 = vsel %vm119, %v116, %v118
    %vm121 = vcmp.eq.f32.partialorder %v116, 0.0
    %v122 = vand.u32 %v116, 2147483648
    %v123 = vsel %vm121, %v122, %v120
    %124 = vst.msk [vmem:[#allocation12] sm:$0xff] %vm65, %v123
    // Predicated region
    $region26: #{tpu_custom_call.1} parent=1 // pred_check
      _
    $region27: #{tpu_custom_call.1} parent=1 // pred_check_branch
      %126 = sbr.rel (0) target = $region29
    $region28: #{tpu_custom_call.1} parent=1 // pred_region
      %s128 = ssub.s32 128, 128
      %129 = vsyncadd [#allocation4], %s128
      %s131 = sshll.u32 [#allocation8], 4
      %s132 = int_to_ptr.vmem [resolvable:$true] %s131
      %134 = dma.vmem_to_hbm [thread:$0]  %s132, 128, %s3, [#allocation4]
    $region29: #{tpu_custom_call.1} parent=1 // pred_fallthru
      _
    // Predicated region
    $region30: #{tpu_custom_call.1} parent=1 // pred_check
      _
    $region31: #{tpu_custom_call.1} parent=1 // pred_check_branch
      %136 = sbr.rel (0) target = $region33
    $region32: #{tpu_custom_call.1} parent=1 // pred_region
      %s138 = ssub.s32 128, 128
      %139 = vsyncadd [#allocation10], %s138
      %s141 = sshll.u32 [#allocation9], 4
      %s142 = int_to_ptr.vmem [resolvable:$true] %s141
      %144 = dma.vmem_to_hbm [thread:$0]  %s142, 128, %s4, [#allocation10]
    $region33: #{tpu_custom_call.1} parent=1 // pred_fallthru
      _
    // Predicated region
    $region34: #{tpu_custom_call.1} parent=1 // pred_check
      _
    $region35: #{tpu_custom_call.1} parent=1 // pred_check_branch
      %146 = sbr.rel (0) target = $region37
    $region36: #{tpu_custom_call.1} parent=1 // pred_region
      %s148 = ssub.s32 128, 128
      %149 = vsyncadd [#allocation10], %s148
      %s151 = sshll.u32 [#allocation11], 4
      %s152 = int_to_ptr.vmem [resolvable:$true] %s151
      %154 = dma.vmem_to_hbm [thread:$0]  %s152, 128, %s5, [#allocation10]
    $region37: #{tpu_custom_call.1} parent=1 // pred_fallthru
      _
    // Predicated region
    $region38: #{tpu_custom_call.1} parent=1 // pred_check
      _
    $region39: #{tpu_custom_call.1} parent=1 // pred_check_branch
      %156 = sbr.rel (0) target = $region41
    $region40: #{tpu_custom_call.1} parent=1 // pred_region
      %s158 = ssub.s32 128, 128
      %159 = vsyncadd [#allocation13], %s158
      %s161 = sshll.u32 [#allocation12], 4
      %s162 = int_to_ptr.vmem [resolvable:$true] %s161
      %164 = dma.vmem_to_hbm [thread:$0]  %s162, 128, %s6, [#allocation13]
    $region41: #{tpu_custom_call.1} parent=1 // pred_fallthru
      _
    // Predicated region
    $region42: #{tpu_custom_call.1} parent=1 // pred_check
      _
    $region43: #{tpu_custom_call.1} parent=1 // pred_check_branch
      %166 = sbr.rel (0) target = $region45
    $region44: #{tpu_custom_call.1} parent=1 // pred_region
      %167 = dma.done [#allocation4], 128
    $region45: #{tpu_custom_call.1} parent=1 // pred_fallthru
      _
    // Predicated region
    $region46: #{tpu_custom_call.1} parent=1 // pred_check
      _
    $region47: #{tpu_custom_call.1} parent=1 // pred_check_branch
      %169 = sbr.rel (0) target = $region49
    $region48: #{tpu_custom_call.1} parent=1 // pred_region
      %170 = dma.done [#allocation10], 128
    $region49: #{tpu_custom_call.1} parent=1 // pred_fallthru
      _
    // Predicated region
    $region50: #{tpu_custom_call.1} parent=1 // pred_check
      _
    $region51: #{tpu_custom_call.1} parent=1 // pred_check_branch
      %172 = sbr.rel (0) target = $region53
    $region52: #{tpu_custom_call.1} parent=1 // pred_region
      %173 = dma.done [#allocation10], 128
    $region53: #{tpu_custom_call.1} parent=1 // pred_fallthru
      _
    // Predicated region
    $region54: #{tpu_custom_call.1} parent=1 // pred_check
      _
    $region55: #{tpu_custom_call.1} parent=1 // pred_check_branch
      %175 = sbr.rel (0) target = $region57
    $region56: #{tpu_custom_call.1} parent=1 // pred_region
      %176 = dma.done [#allocation13], 128
    $region57: #{tpu_custom_call.1} parent=1 // pred_fallthru
      _
    %177 = vsyncpa [#allocation3], 1
    %178 = vsyncpa [#allocation6], 1
    %179 = vsyncpa [#allocation4], 1
    %180 = vsyncpa [#allocation10], 1
    %181 = vsyncpa [#allocation13], 1

</llo_original>
